<compile_context>
chip_gen: v6e
topology: v6e:2x2x1
jax: 0.10.0
libtpu: 0.0.40
codegen_flags: <defaults>
</compile_context>

<pallas_src>
import functools

import jax
import jax.numpy as jnp
from jax.experimental import pallas as pl
from jax.experimental.pallas import tpu as pltpu


# -----------------------------------------------------------------------------
# Pallas kernel: jump-relu -> add eps -> row-normalize.
# -----------------------------------------------------------------------------
def _rescaled_jump_relu_kernel(thr_ref, x_ref, o_ref, *, eps):
    # thr_ref: SMEM (1,) : clamped threshold scalar.
    thr = thr_ref[0]

    x = x_ref[...]                                        # (TB, F)
    # NOTE: jnp.where zeroes NaN inputs below the threshold, whereas the torch
    # `x * mask` form propagates NaN (NaN * 0 = NaN). Irrelevant for clean data.
    jumped = jnp.where(x >= thr, x, jnp.zeros_like(x)) + eps

    denom = jnp.sum(jumped, axis=-1, keepdims=True)       # per-row lane reduce
    # Exact reciprocal (approx=False default): all-below-threshold rows have
    # denom ~= F*eps, where an approximate rcp would exceed 1e-5 tolerance.
    o_ref[...] = jumped * pl.reciprocal(denom)


# -----------------------------------------------------------------------------
# Tile-size / VMEM budgeting helpers.
# -----------------------------------------------------------------------------
def _round_up(x, m):
    return ((x + m - 1) // m) * m


def _sublane_multiple(dtype):
    # 8 for f32, 16 for bf16, 32 for int8/fp8: keeps (sublane, 128) tiles legal.
    return max(8, 32 // jnp.dtype(dtype).itemsize)


def _tpu_info():
    """Returns (is_v7x, per-TensorCore VMEM capacity bytes, conservative)."""
    vmem_cap = 64 << 20            # conservative fallback (v7x per-TC VMEM)
    is_v7x = False
    try:
        kind = jax.devices()[0].device_kind.lower()
        is_v7x = "v7" in kind
    except Exception:
        pass
    try:
        info = pltpu.get_tpu_info()
        vmem_cap = int(getattr(info, "vmem_capacity_bytes", vmem_cap))
    except Exception:
        pass
    if is_v7x:
        # v7x has 64 MiB per TensorCore; clamp in case info reports per-chip.
        vmem_cap = min(vmem_cap, 64 << 20)
    return is_v7x, vmem_cap


# -----------------------------------------------------------------------------
# Wrapper.
# -----------------------------------------------------------------------------
def rescaled_jump_relu(x, threshold, *, constraint_min=0.0, constraint_max=5.0,
                       eps=1e-10):
    """x: (B, F). Normalization over axis 1 (features). Forward only."""
    B, F = x.shape
    itemsize = jnp.dtype(x.dtype).itemsize
    sub = _sublane_multiple(x.dtype)
    is_v7x, vmem_cap = _tpu_info()

    # Threshold clamp on-device: works for Python floats and traced parameters.
    thr_arr = jnp.clip(jnp.asarray(threshold, dtype=x.dtype),
                       constraint_min, constraint_max).reshape(1)

    # --- batch-tile sizing (feature axis stays whole / lane-resident) --------
    # Budget against the VMEM-resident (lane-padded) row footprint.
    row_bytes = _round_up(F, 128) * itemsize

    if B <= sub:
        TB = B                                  # block == full batch extent
    else:
        # Byte-based block target: bigger blocks amortize ~0.35us/step overhead.
        target_bytes = (8 << 20) if is_v7x else (4 << 20)
        tb_target = max(sub, (target_bytes // row_bytes) // sub * sub)
        # Keep in+out double-buffered (4 live block buffers) inside VMEM.
        budget = int(vmem_cap * (0.5 if is_v7x else 0.6))
        tb_vmem = max(sub, (budget // (4 * row_bytes)) // sub * sub)
        TB = min(tb_target, tb_vmem)
        # Enough grid steps for DMA overlap: >=2 per TC => >=4 total on v7x.
        min_steps = 4 if is_v7x else 2
        TB = min(TB, max(sub, _round_up(pl.cdiv(B, min_steps), sub)))
        TB = min(TB, _round_up(B, sub))
        TB = max(sub, TB)

    grid = (pl.cdiv(B, TB),)

    # VMEM limit: what the pipeline actually needs plus a few MiB headroom, so
    # we do not starve surrounding XLA fusions (v5e default scoped VMEM is only
    # 16 MiB); capped at 75% of per-core capacity on all generations.
    block_bytes = TB * row_bytes
    vmem_limit = int(min(max(4 * block_bytes + (4 << 20), 8 << 20),
                         int(vmem_cap * 0.75)))

    kernel = functools.partial(_rescaled_jump_relu_kernel, eps=eps)

    # TODO(synk): no feature-axis tiling — a single (TB, F) block must fit in
    # VMEM; extremely wide F (multi-100K f32 features) would need a 2-pass sum.
    return pl.pallas_call(
        kernel,
        out_shape=jax.ShapeDtypeStruct((B, F), x.dtype),
        grid_spec=pl.GridSpec(
            grid=grid,
            in_specs=[
                pl.BlockSpec(memory_space=pltpu.SMEM),       # threshold scalar
                pl.BlockSpec((TB, F), lambda i: (i, 0)),     # x tile (full F)
            ],
            out_specs=pl.BlockSpec((TB, F), lambda i: (i, 0)),
        ),
        compiler_params=pltpu.CompilerParams(
            dimension_semantics=("parallel",),
            vmem_limit_bytes=vmem_limit,
        ),
    )(thr_arr, x)


# -----------------------------------------------------------------------------
# Pure-JAX reference for a sanity check.
# -----------------------------------------------------------------------------
def _reference(x, thr, eps):
    mask = (x >= thr).astype(x.dtype)
    j = x * mask + eps
    return j / jnp.sum(j, axis=1, keepdims=True)


if __name__ == "__main__":
    key = jax.random.PRNGKey(0)
    B, F = 16, 32   # small shapes consistent with the module (batch, hidden)
    x = jax.random.normal(key, (B, F), dtype=jnp.float32)

    # Deterministic parameter value (module __init__ default).
    initial_threshold = 0.1   # nn.Parameter(torch.tensor(0.1))

    out = rescaled_jump_relu(x, initial_threshold,
                             constraint_min=0.0, constraint_max=5.0, eps=1e-10)
    out = jax.block_until_ready(out)

    ref = _reference(x, 0.1, 1e-10)
    assert out.shape == (B, F) and out.dtype == jnp.float32
    assert jnp.allclose(out, ref, rtol=1e-5, atol=1e-5)

    print("KERNEL_OK")
</pallas_src>

<mosaic_0001>
module attributes {stable_mosaic.version = 11 : i64} {
  func.func @_rescaled_jump_relu_kernel(%arg0: i32, %arg1: memref<1xf32, #tpu.memory_space<smem>>, %arg2: memref<8x32xf32, #tpu.memory_space<vmem>>, %arg3: memref<8x32xf32, #tpu.memory_space<vmem>>) attributes {dimension_semantics = [#tpu.dimension_semantics<parallel>], iteration_bounds = array<i64: 2>, scalar_prefetch = 0 : i64, scratch_operands = 0 : i64, tpu.core_type = #tpu.core_type<tc>, window_params = [{transform_indices = @transform_0, window_bounds = array<i64: 1>}, {transform_indices = @transform_1, window_bounds = array<i64: 8, 32>}, {transform_indices = @transform_2, window_bounds = array<i64: 8, 32>}]} {
    %c0 = arith.constant 0 : index
    %0 = memref.load %arg1[%c0] : memref<1xf32, #tpu.memory_space<smem>>
    %c0_0 = arith.constant 0 : index
    %c0_1 = arith.constant 0 : index
    %1 = vector.load %arg2[%c0_0, %c0_1] : memref<8x32xf32, #tpu.memory_space<vmem>>, vector<8x32xf32>
    %2 = vector.broadcast %0 : f32 to vector<8x32xf32>
    %3 = arith.cmpf oge, %1, %2 : vector<8x32xf32>
    %cst = arith.constant 0.000000e+00 : f32
    %4 = vector.broadcast %cst : f32 to vector<8x32xf32>
    %5 = arith.select %3, %1, %4 : vector<8x32xi1>, vector<8x32xf32>
    %cst_2 = arith.constant 1.000000e-10 : f32
    %6 = vector.broadcast %cst_2 : f32 to vector<8x32xf32>
    %7 = arith.addf %5, %6 : vector<8x32xf32>
    %cst_3 = arith.constant dense<0.000000e+00> : vector<8xf32>
    %8 = vector.multi_reduction <add>, %7, %cst_3 [1] : vector<8x32xf32> to vector<8xf32>
    %9 = vector.shape_cast %8 : vector<8xf32> to vector<8x1xf32>
    %10 = tpu.reciprocal %9 : vector<8x1xf32> -> vector<8x1xf32>
    %11 = vector.broadcast %10 : vector<8x1xf32> to vector<8x32xf32>
    %12 = arith.mulf %7, %11 : vector<8x32xf32>
    %c0_4 = arith.constant 0 : index
    %c0_5 = arith.constant 0 : index
    %13 = vector.load %arg3[%c0_4, %c0_5] : memref<8x32xf32, #tpu.memory_space<vmem>>, vector<8x32xf32>
    tpu.vector_store %arg3[%c0_4, %c0_5], %12 {strides = array<i32>} : memref<8x32xf32, #tpu.memory_space<vmem>>, vector<8x32xf32>,
    return
  }
  func.func @transform_0(%arg0: i32) -> i32 {
    %c0_i32 = arith.constant 0 : i32
    %c0_i32_0 = arith.constant 0 : i32
    return %c0_i32 : i32
  }
  func.func @transform_1(%arg0: i32) -> (i32, i32) {
    %c0_i32 = arith.constant 0 : i32
    %c0_i32_0 = arith.constant 0 : i32
    return %arg0, %c0_i32 : i32, i32
  }
  func.func @transform_2(%arg0: i32) -> (i32, i32) {
    %c0_i32 = arith.constant 0 : i32
    %c0_i32_0 = arith.constant 0 : i32
    return %arg0, %c0_i32 : i32, i32
  }
}

</mosaic_0001>

<llo_original>
// kernel: tpu_custom_call.1
$region0: #{tpu_custom_call.1}
  #allocation0 [shape = 'u32[]', space=smem, size = 0x4, offset = 0x4, fixed_abs, tag = 'smem constant byte address 0x4 - core index']
  #allocation1 [shape = 'u32[144,128]{1,0:T(1,128)}', space=vmem, size = 0x12000, scoped, tag = 'internal scratch']
  #allocation2 [shape = 'f32[1]{0:T(128)S(6)}', space=smem, size = 0x200, scoped, tag = 'scoped memory for tpu_custom_call.1']
  %s0 = inlined_call_operand.<no memory space> [shape: f32[1], index: 0, kind: input, shape index: {}]
  %s1 = inlined_call_operand.hbm [shape: f32[16,32], index: 1, kind: input, shape index: {}]
  %s2 = inlined_call_operand.hbm [shape: f32[16,32], index: 2, kind: output, shape index: {}]
  %s3 = sld [smem:[#allocation0]]
  $region45: #{tpu_custom_call.1} parent=0
    _
  %s5 = ssub.s32 1, %s3
  %s6 = scalar_select 0, %s5, %s3
  %7 = sst [smem:[#allocation2]] %s0
  $region1: #{tpu_custom_call.1} parent=0
    #allocation3 [shape = 'u8[8192]{0}', space=vmem, size = 0x2000, scoped, tag = 'input window, operand 1']
    #allocation4 [shape = 's32[2]{0}', space=sflag, size = 0x8, scoped, tag = 'scoped memory for tpu_custom_call.1']
    #allocation5 [shape = 's32[2]{0}', space=sflag, size = 0x8, scoped, tag = 'scoped memory for tpu_custom_call.1']
    #allocation6 [shape = 'u8[8192]{0}', space=vmem, size = 0x2000, scoped, tag = 'output window, operand 0']
    %8 = vsyncpa [#allocation4], 0
    %s9 = scalar_lea.sflag [#allocation4], 1
    %10 = vsyncpa %s9, 0
    %11 = vsyncpa [#allocation5], 0
    %s12 = scalar_lea.sflag [#allocation5], 1
    %13 = vsyncpa %s12, 0
    loop: start=0, step=1, limit=4
    $region2: #{tpu_custom_call.1} parent=1 // loop_pre_header
      _
    $region3: #{tpu_custom_call.1} parent=1 // loop_header
      %s15 = sphi 0, %s19
      %p16 = scmp.ge.s32.totalorder %s15, 4
      %s23 = sphi 0, %s23
      %s25 = sphi 0, %s23
      %s26 = sphi 0, %s25
      %s40 = sphi 0, %s26
      %s46 = sphi 0, %s48
      %s49 = sphi 0, %s46
      %s50 = sphi 0, %s49
      %s66 = sphi 0, %s50
      %s72 = sphi 0, %s74
      %s75 = sphi 0, %s72
      %s76 = sphi 0, %s75
      %s92 = sphi 0, %s76
    $region4: #{tpu_custom_call.1} parent=1 // loop_header_branch
      %18 = sbr.rel (%p16) target = $region8
    $region5: #{tpu_custom_call.1} parent=1 // loop_body
      %s20 = ssub.s32 %s15, 1
      %s21 = ssub.s32 %s15, 2
      %s22 = sadd.s32 %s15, 1
      %s24 = sadd.s32 %s23, 1
      %p27 = scmp.eq.s32.totalorder %s15, 1
      %p28 = scmp.ne.s32.totalorder %s23, %s25
      %p29 = scmp.eq.s32.totalorder %s15, 0
      %p30 = por %p28, %p29
      %p31 = scmp.ne.s32.totalorder %s23, %s25
      %p32 = scmp.eq.s32.totalorder %s20, 1
      %p33 = por %p31, %p32
      %p34 = scmp.ne.s32.totalorder %s25, %s26
      %p35 = scmp.eq.s32.totalorder %s20, 0
      %p36 = por %p34, %p35
      %p37 = scmp.ne.s32.totalorder %s25, %s26
      %p38 = scmp.eq.s32.totalorder %s21, 1
      %p39 = por %p37, %p38
      %p41 = scmp.ne.s32.totalorder %s26, %s40
      %p42 = scmp.eq.s32.totalorder %s21, 0
      %p43 = por %p41, %p42
      %s44 = ssub.s32 %s15, %s22
      %p45 = scmp.eq.s32.totalorder %s44, 0
      %s47 = sadd.s32 %s46, 1
      %s48 = scalar_select %p45, %s46, %s47
      %p51 = pneg %p45
      %p52 = scmp.eq.s32.totalorder %s15, 1
      %p53 = por %p51, %p52
      %p54 = scmp.ne.s32.totalorder %s46, %s49
      %p55 = scmp.eq.s32.totalorder %s15, 0
      %p56 = por %p54, %p55
      %p57 = scmp.ne.s32.totalorder %s46, %s49
      %p58 = scmp.eq.s32.totalorder %s20, 1
      %p59 = por %p57, %p58
      %p60 = scmp.ne.s32.totalorder %s49, %s50
      %p61 = scmp.eq.s32.totalorder %s20, 0
      %p62 = por %p60, %p61
      %p63 = scmp.ne.s32.totalorder %s49, %s50
      %p64 = scmp.eq.s32.totalorder %s21, 1
      %p65 = por %p63, %p64
      %p67 = scmp.ne.s32.totalorder %s50, %s66
      %p68 = scmp.eq.s32.totalorder %s21, 0
      %p69 = por %p67, %p68
      %s70 = ssub.s32 %s15, %s22
      %p71 = scmp.eq.s32.totalorder %s70, 0
      %s73 = sadd.s32 %s72, 1
      %s74 = scalar_select %p71, %s72, %s73
      %p77 = pneg %p71
      %p78 = scmp.eq.s32.totalorder %s15, 1
      %p79 = por %p77, %p78
      %p80 = scmp.ne.s32.totalorder %s72, %s75
      %p81 = scmp.eq.s32.totalorder %s15, 0
      %p82 = por %p80, %p81
      %p83 = scmp.ne.s32.totalorder %s72, %s75
      %p84 = scmp.eq.s32.totalorder %s20, 1
      %p85 = por %p83, %p84
      %p86 = scmp.ne.s32.totalorder %s75, %s76
      %p87 = scmp.eq.s32.totalorder %s20, 0
      %p88 = por %p86, %p87
      %p89 = scmp.ne.s32.totalorder %s75, %s76
      %p90 = scmp.eq.s32.totalorder %s21, 1
      %p91 = por %p89, %p90
      %p93 = scmp.ne.s32.totalorder %s76, %s92
      %p94 = scmp.eq.s32.totalorder %s21, 0
      %p95 = por %p93, %p94
      %p96 = scmp.le.s32.totalorder 1, %s15
      %p97 = scmp.lt.s32.totalorder %s15, 3
      %p98 = pnand %p96, %p97
      %p99 = pneg %p98
      // Predicated region
      $region9: #{tpu_custom_call.1} parent=5 // pred_check
        _
      $region10: #{tpu_custom_call.1} parent=5 // pred_check_branch
        %101 = sbr.rel (%p98) target = $region12
      $region11: #{tpu_custom_call.1} parent=5 // pred_region
        %s102 = ssub.s32 %s15, 1
        // Predicated region
        $region13: #{tpu_custom_call.1} parent=11 // pred_check
          %p103 = pneg %p36
        $region14: #{tpu_custom_call.1} parent=11 // pred_check_branch
          %105 = sbr.rel (%p103) target = $region16
        $region15: #{tpu_custom_call.1} parent=11 // pred_region
          _
        $region16: #{tpu_custom_call.1} parent=11 // pred_fallthru
          _
      $region12: #{tpu_custom_call.1} parent=5 // pred_fallthru
        _
      %p106 = scmp.lt.s32.totalorder %s15, 2
      // Predicated region
      $region17: #{tpu_custom_call.1} parent=5 // pred_check
        %p107 = pneg %p106
      $region18: #{tpu_custom_call.1} parent=5 // pred_check_branch
        %109 = sbr.rel (%p107) target = $region20
      $region19: #{tpu_custom_call.1} parent=5 // pred_region
        // Predicated region
        $region21: #{tpu_custom_call.1} parent=19 // pred_check
          %p110 = pneg %p56
        $region22: #{tpu_custom_call.1} parent=19 // pred_check_branch
          %112 = sbr.rel (%p110) target = $region24
        $region23: #{tpu_custom_call.1} parent=19 // pred_region
          %s113 = sand.u32 %s46, 1
          %s114 = scalar_lea.sflag [#allocation4], %s113
          %s115 = sand.u32 %s46, 1
          %s116 = smul.addr %s115, 8
          %s117 = scalar_lea.vmem [#allocation3], %s116
          %s119 = ssub.s32 128, 128
          %120 = vsyncadd %s114, %s119
          %s121 = smul.addr %s15, 128
          %s122 = scalar_lea.hbm %s1, %s121
          %s124 = sshll.u32 %s117, 4
          %s125 = int_to_ptr.vmem [resolvable:$true] %s124
          %127 = dma.hbm_to_vmem [thread:$0]  %s122, 128, %s125, %s114
        $region24: #{tpu_custom_call.1} parent=19 // pred_fallthru
          _
      $region20: #{tpu_custom_call.1} parent=5 // pred_fallthru
        _
      %p128 = scmp.le.s32.totalorder 1, %s15
      %p129 = scmp.lt.s32.totalorder %s15, 3
      %p130 = pnand %p128, %p129
      %p131 = pneg %p130
      // Predicated region
      $region25: #{tpu_custom_call.1} parent=5 // pred_check
        _
      $region26: #{tpu_custom_call.1} parent=5 // pred_check_branch
        %133 = sbr.rel (%p130) target = $region28
      $region27: #{tpu_custom_call.1} parent=5 // pred_region
        %s134 = ssub.s32 %s15, 1
        %s135 = sand.u32 %s49, 1
        %s136 = scalar_lea.sflag [#allocation4], %s135
        %s137 = sand.u32 %s49, 1
        %s138 = smul.addr %s137, 8
        %s139 = scalar_lea.vmem [#allocation3], %s138
        // Predicated region
        $region29: #{tpu_custom_call.1} parent=27 // pred_check
          %p140 = pneg %p62
        $region30: #{tpu_custom_call.1} parent=27 // pred_check_branch
          %142 = sbr.rel (%p140) target = $region32
        $region31: #{tpu_custom_call.1} parent=27 // pred_region
          %143 = dma.done %s136, 128
        $region32: #{tpu_custom_call.1} parent=27 // pred_fallthru
          _
        %p144 = pneg %p36
        %p145 = pneg %p33
        %s146 = sand.u32 %s49, 1
        %s147 = scalar_lea.sflag [#allocation4], %s146
        %s148 = sand.u32 %s49, 1
        %s149 = smul.addr %s148, 8
        %s150 = scalar_lea.vmem [#allocation3], %s149
        %p151 = pneg %p62
        %p152 = pneg %p59
        %p153 = pneg %p88
        %p154 = pneg %p85
        %s155 = sand.u32 %s75, 1
        %s156 = scalar_lea.sflag [#allocation5], %s155
        %s157 = sand.u32 %s75, 1
        %s158 = smul.addr %s157, 8
        %s159 = scalar_lea.vmem [#allocation6], %s158
        %s160 = sld [smem:[#allocation2]]
        %v161 = vld [vmem:[%s139] sm:$0xff]
        %v162 = vstv %s160
        %vm163 = vcmp.ge.f32.partialorder %v161, %v162
        %v164 = vsel %vm163, %v161, 0.0
        %v165 = vadd.f32 %v164, 1e-10
        %vm166 = vcmask 261120
        %v167 = vsel %vm166, %v165, 0.0
        %168 = vadd.xlane.f32.xlu0 %v167
        %v169 = vpop.xlane.xlu0 %168
        %v170 = vrcp.pop %v169
        %v171 = vmul.f32 %v165, %v170
        %172 = vst.msk [vmem:[%s159] sm:$0xff] %vm166, %v171
        %s173 = sand.u32 %s75, 1
        %s174 = scalar_lea.sflag [#allocation5], %s173
        %s175 = sand.u32 %s75, 1
        %s176 = smul.addr %s175, 8
        %s177 = scalar_lea.vmem [#allocation6], %s176
        // Predicated region
        $region33: #{tpu_custom_call.1} parent=27 // pred_check
          %p178 = pneg %p85
        $region34: #{tpu_custom_call.1} parent=27 // pred_check_branch
          %180 = sbr.rel (%p178) target = $region36
        $region35: #{tpu_custom_call.1} parent=27 // pred_region
          %s182 = ssub.s32 128, 128
          %183 = vsyncadd %s174, %s182
          %s184 = smul.addr %s20, 128
          %s185 = scalar_lea.hbm %s2, %s184
          %s187 = sshll.u32 %s177, 4
          %s188 = int_to_ptr.vmem [resolvable:$true] %s187
          %190 = dma.vmem_to_hbm [thread:$0]  %s188, 128, %s185, %s174
        $region36: #{tpu_custom_call.1} parent=27 // pred_fallthru
          _
      $region28: #{tpu_custom_call.1} parent=5 // pred_fallthru
        _
      %p191 = scmp.le.s32.totalorder 2, %s15
      // Predicated region
      $region37: #{tpu_custom_call.1} parent=5 // pred_check
        %p192 = pneg %p191
      $region38: #{tpu_custom_call.1} parent=5 // pred_check_branch
        %194 = sbr.rel (%p192) target = $region40
      $region39: #{tpu_custom_call.1} parent=5 // pred_region
        %s195 = ssub.s32 %s15, 2
        // Predicated region
        $region41: #{tpu_custom_call.1} parent=39 // pred_check
          %p196 = pneg %p91
        $region42: #{tpu_custom_call.1} parent=39 // pred_check_branch
          %198 = sbr.rel (%p196) target = $region44
        $region43: #{tpu_custom_call.1} parent=39 // pred_region
          %s199 = sand.u32 %s76, 1
          %s200 = scalar_lea.sflag [#allocation5], %s199
          %s201 = sand.u32 %s76, 1
          %s202 = smul.addr %s201, 8
          %s203 = scalar_lea.vmem [#allocation6], %s202
          %204 = dma.done %s200, 128
        $region44: #{tpu_custom_call.1} parent=39 // pred_fallthru
          _
      $region40: #{tpu_custom_call.1} parent=5 // pred_fallthru
        _
    $region6: #{tpu_custom_call.1} parent=1 // loop_footer
      %s19 = sadd.s32 1, %s15
    $region7: #{tpu_custom_call.1} parent=1 // loop_footer_branch
      %14 = sbr.rel target = $region3
    $region8: #{tpu_custom_call.1} parent=1 // loop_exit
      _
    %205 = vsyncpa [#allocation4], 1
    %s206 = scalar_lea.sflag [#allocation4], 1
    %207 = vsyncpa %s206, 1
    %208 = vsyncpa [#allocation5], 1
    %s209 = scalar_lea.sflag [#allocation5], 1
    %210 = vsyncpa %s209, 1

</llo_original>
